<compile_context>
chip_gen: v6e
topology: v6e:2x2x1
jax: 0.10.0
libtpu: 0.0.40
codegen_flags: <defaults>
</compile_context>

<pallas_src>
import jax
import jax.numpy as jnp
from jax.experimental import pallas as pl
from jax.experimental.pallas import tpu as pltpu

EPS = 1e-5


# ------------------------------ Pallas kernel ------------------------------ #
def _convblock_kernel(w_ref, p_ref, g_ref, b_ref, o_ref):
    """Fused conv3x3 (one transposed matmul) + BN (batch stats) + ReLU.

    w_ref: (Cout, 9*Cin)   p_ref: (9*Cin, M)   g_ref/b_ref: (Cout, 1)
    o_ref: (Cout, M)  -- M on the lane axis, so all stores are lane-dense.
    """
    m = p_ref.shape[1]
    # conv3x3 as a single (Cout, K) x (K, M) MXU contraction, K = 9*Cin.
    y = jnp.dot(w_ref[...], p_ref[...], preferred_element_type=jnp.float32)
    # BatchNorm2d, training mode: biased batch statistics, centered two-pass.
    inv_m = 1.0 / m
    mean = jnp.sum(y, axis=1, keepdims=True) * inv_m           # (Cout, 1) XLU
    yc = y - mean
    var = jnp.sum(yc * yc, axis=1, keepdims=True) * inv_m      # (Cout, 1)
    scale = g_ref[...] * jax.lax.rsqrt(var + EPS)              # EUP rsqrt, f32
    o_ref[...] = jnp.maximum(yc * scale + b_ref[...], 0.0)     # ReLU


def _fused_convblock(w_mat, patches_t, gamma, beta):
    Cout, K = w_mat.shape
    M = patches_t.shape[1]
    vspec = pl.BlockSpec(memory_space=pltpu.MemorySpace.VMEM)
    nbytes = 4 * (K * M + Cout * K + 2 * Cout + Cout * M)
    return pl.pallas_call(
        _convblock_kernel,
        out_shape=jax.ShapeDtypeStruct((Cout, M), jnp.float32),
        in_specs=[vspec, vspec, vspec, vspec],
        out_specs=vspec,
        cost_estimate=pl.CostEstimate(
            flops=2 * Cout * K * M,
            transcendentals=Cout,
            bytes_accessed=nbytes),
        compiler_params=pltpu.CompilerParams(
            # Real resident footprint is ~130 KiB after (8,128) padding; this
            # keeps the budget explicit and safe on v5e/v6e/v7x if shapes grow.
            vmem_limit_bytes=16 * 1024 * 1024),
    )(w_mat, patches_t, gamma, beta)


# ------------------------------- JAX wrapper -------------------------------- #
@jax.jit
def convblock_forward(x_nchw, w_mat, gamma, beta):
    """ConvBlock.forward.  x: NCHW f32; w_mat: (Cout, 9*Cin) tap matrix."""
    N, Cin, H, W = x_nchw.shape
    Cout = w_mat.shape[0]
    M = N * H * W
    # Channel-major straight from NCHW: (Cin, N, H, W) is a leading-axis swap
    # (minor H,W tiles untouched), then replicate-pad by 1 in H and W.
    x_c = jnp.transpose(x_nchw, (1, 0, 2, 3))
    xp = jnp.pad(x_c, ((0, 0), (0, 0), (1, 1), (1, 1)), mode='edge')
    # Transposed im2col: rows ordered (dy, dx, ci), columns flattened (n, h, w).
    taps = [xp[:, :, dy:dy + H, dx:dx + W].reshape(Cin, M)
            for dy in range(3) for dx in range(3)]
    patches_t = jnp.concatenate(taps, axis=0)                   # (9*Cin, M)
    y = _fused_convblock(w_mat, patches_t, gamma, beta)         # (Cout, M)
    # (Cout, N, H, W) -> NCHW is another cheap leading-axis swap.
    return jnp.transpose(y.reshape(Cout, N, H, W), (1, 0, 2, 3))


# ---------------------------- pure-JAX reference ---------------------------- #
def _ref_convblock(x_nchw, w_pt, gamma, beta):
    xp = jnp.pad(x_nchw, ((0, 0), (0, 0), (1, 1), (1, 1)), mode='edge')
    y = jax.lax.conv_general_dilated(
        xp, w_pt, (1, 1), 'VALID',
        dimension_numbers=('NCHW', 'OIHW', 'NCHW'),
        precision=jax.lax.Precision.HIGHEST)
    mean = jnp.mean(y, axis=(0, 2, 3), keepdims=True)
    var = jnp.var(y, axis=(0, 2, 3), keepdims=True)             # biased (train)
    y = (y - mean) / jnp.sqrt(var + EPS) * gamma.reshape(1, -1, 1, 1) \
        + beta.reshape(1, -1, 1, 1)
    return jax.nn.relu(y)


# ----------------------------------- main ----------------------------------- #
if __name__ == "__main__":
    key = jax.random.PRNGKey(0)
    N, Cin, H, W = 2, 4, 16, 16
    Cout = 16
    kx, kw = jax.random.split(key)
    x = jax.random.normal(kx, (N, Cin, H, W), jnp.float32)

    # PyTorch-style init: Conv2d kaiming-uniform bound 1/sqrt(fan_in) with
    # fan_in = 9*Cin; BatchNorm weight=1, bias=0.
    bound = 1.0 / (9 * Cin) ** 0.5
    w_pt = jax.random.uniform(kw, (Cout, Cin, 3, 3), jnp.float32, -bound, bound)
    # (Cout, Cin, 3, 3) -> (Cout, 3, 3, Cin) -> (Cout, 9*Cin); column order
    # (dy, dx, ci) matches the patch rows built in convblock_forward.
    w_mat = jnp.transpose(w_pt, (0, 2, 3, 1)).reshape(Cout, 9 * Cin)
    gamma = jnp.ones((Cout, 1), jnp.float32)
    beta = jnp.zeros((Cout, 1), jnp.float32)

    out = convblock_forward(x, w_mat, gamma, beta)
    jax.block_until_ready(out)
    assert out.shape == (N, Cout, H, W) and out.dtype == jnp.float32

    ref = _ref_convblock(x, w_pt, gamma.reshape(-1), beta.reshape(-1))
    max_err = float(jnp.max(jnp.abs(out - ref)))
    assert jnp.allclose(out, ref, atol=1e-2, rtol=1e-2), max_err

    print("KERNEL_OK")
</pallas_src>

<mosaic_0001>
module attributes {stable_mosaic.version = 11 : i64} {
  func.func @_convblock_kernel(%arg0: memref<16x36xf32, #tpu.memory_space<vmem>>, %arg1: memref<36x512xf32, #tpu.memory_space<vmem>>, %arg2: memref<16x1xf32, #tpu.memory_space<vmem>>, %arg3: memref<16x1xf32, #tpu.memory_space<vmem>>, %arg4: memref<16x512xf32, #tpu.memory_space<vmem>>) attributes {dimension_semantics = [], scalar_prefetch = 0 : i64, scratch_operands = 0 : i64, tpu.core_type = #tpu.core_type<tc>} {
    %c0 = arith.constant 0 : index
    %c0_0 = arith.constant 0 : index
    %0 = vector.load %arg0[%c0, %c0_0] : memref<16x36xf32, #tpu.memory_space<vmem>>, vector<16x36xf32>
    %c0_1 = arith.constant 0 : index
    %c0_2 = arith.constant 0 : index
    %1 = vector.load %arg1[%c0_1, %c0_2] : memref<36x512xf32, #tpu.memory_space<vmem>>, vector<36x512xf32>
    %cst = arith.constant dense<0.000000e+00> : vector<16x512xf32>
    %2 = tpu.matmul %0, %1, %cst {dimension_numbers = #tpu.dot_dimension_numbers<[1], [0], [0], [1], [0, 0, 1, 1], [], []>} : vector<16x36xf32>, vector<36x512xf32>, vector<16x512xf32> -> vector<16x512xf32>
    %cst_3 = arith.constant dense<0.000000e+00> : vector<16xf32>
    %3 = vector.multi_reduction <add>, %2, %cst_3 [1] : vector<16x512xf32> to vector<16xf32>
    %4 = vector.shape_cast %3 : vector<16xf32> to vector<16x1xf32>
    %cst_4 = arith.constant 0.001953125 : f32
    %5 = vector.broadcast %cst_4 : f32 to vector<16x1xf32>
    %6 = arith.mulf %4, %5 : vector<16x1xf32>
    %7 = vector.broadcast %6 : vector<16x1xf32> to vector<16x512xf32>
    %8 = arith.subf %2, %7 : vector<16x512xf32>
    %9 = arith.mulf %8, %8 : vector<16x512xf32>
    %cst_5 = arith.constant dense<0.000000e+00> : vector<16xf32>
    %10 = vector.multi_reduction <add>, %9, %cst_5 [1] : vector<16x512xf32> to vector<16xf32>
    %11 = vector.shape_cast %10 : vector<16xf32> to vector<16x1xf32>
    %cst_6 = arith.constant 0.001953125 : f32
    %12 = vector.broadcast %cst_6 : f32 to vector<16x1xf32>
    %13 = arith.mulf %11, %12 : vector<16x1xf32>
    %c0_7 = arith.constant 0 : index
    %c0_8 = arith.constant 0 : index
    %14 = vector.load %arg2[%c0_7, %c0_8] : memref<16x1xf32, #tpu.memory_space<vmem>>, vector<16x1xf32>
    %cst_9 = arith.constant 9.99999974E-6 : f32
    %15 = vector.broadcast %cst_9 : f32 to vector<16x1xf32>
    %16 = arith.addf %13, %15 : vector<16x1xf32>
    %17 = math.rsqrt %16 : vector<16x1xf32>
    %18 = arith.mulf %14, %17 : vector<16x1xf32>
    %19 = vector.broadcast %18 : vector<16x1xf32> to vector<16x512xf32>
    %20 = arith.mulf %8, %19 : vector<16x512xf32>
    %c0_10 = arith.constant 0 : index
    %c0_11 = arith.constant 0 : index
    %21 = vector.load %arg3[%c0_10, %c0_11] : memref<16x1xf32, #tpu.memory_space<vmem>>, vector<16x1xf32>
    %22 = vector.broadcast %21 : vector<16x1xf32> to vector<16x512xf32>
    %23 = arith.addf %20, %22 : vector<16x512xf32>
    %cst_12 = arith.constant 0.000000e+00 : f32
    %24 = vector.broadcast %cst_12 : f32 to vector<16x512xf32>
    %25 = arith.maximumf %23, %24 : vector<16x512xf32>
    %c0_13 = arith.constant 0 : index
    %c0_14 = arith.constant 0 : index
    %26 = vector.load %arg4[%c0_13, %c0_14] : memref<16x512xf32, #tpu.memory_space<vmem>>, vector<16x512xf32>
    tpu.vector_store %arg4[%c0_13, %c0_14], %25 {strides = array<i32>} : memref<16x512xf32, #tpu.memory_space<vmem>>, vector<16x512xf32>,
    return
  }
}

</mosaic_0001>

<llo_original>
// kernel: convblock_forward.1
$region0: #{convblock_forward.1}
  #allocation0 [shape = 'u32[]', space=smem, size = 0x4, offset = 0x4, fixed_abs, tag = 'smem constant byte address 0x4 - core index']
  #allocation1 [shape = 'u32[144,128]{1,0:T(1,128)}', space=vmem, size = 0x12000, scoped, tag = 'internal scratch']
  %s0 = inlined_call_operand.vmem [shape: f32[16,36], index: 0, kind: input, shape index: {}]
  %s1 = inlined_call_operand.vmem [shape: f32[36,512], index: 1, kind: input, shape index: {}]
  %s2 = inlined_call_operand.vmem [shape: f32[16,1], index: 2, kind: input, shape index: {}]
  %s3 = inlined_call_operand.vmem [shape: f32[16,1], index: 3, kind: input, shape index: {}]
  %s4 = inlined_call_operand.vmem [shape: f32[16,512], index: 4, kind: output, shape index: {}]
  %s5 = sld [smem:[#allocation0]]
  $region26: #{convblock_forward.1} parent=0
    _
  %s7 = ssub.s32 1, %s5
  %s8 = scalar_select 0, %s7, %s5
  // Predicated region
  $region2: #{convblock_forward.1} parent=0 // pred_check
    _
  $region3: #{convblock_forward.1} parent=0 // pred_check_branch
    %10 = sbr.rel (0) target = $region5
  $region4: #{convblock_forward.1} parent=0 // pred_region
    _
  $region5: #{convblock_forward.1} parent=0 // pred_fallthru
    _
  // Predicated region
  $region6: #{convblock_forward.1} parent=0 // pred_check
    _
  $region7: #{convblock_forward.1} parent=0 // pred_check_branch
    %12 = sbr.rel (0) target = $region9
  $region8: #{convblock_forward.1} parent=0 // pred_region
    _
  $region9: #{convblock_forward.1} parent=0 // pred_fallthru
    _
  // Predicated region
  $region10: #{convblock_forward.1} parent=0 // pred_check
    _
  $region11: #{convblock_forward.1} parent=0 // pred_check_branch
    %14 = sbr.rel (0) target = $region13
  $region12: #{convblock_forward.1} parent=0 // pred_region
    _
  $region13: #{convblock_forward.1} parent=0 // pred_fallthru
    _
  // Predicated region
  $region14: #{convblock_forward.1} parent=0 // pred_check
    _
  $region15: #{convblock_forward.1} parent=0 // pred_check_branch
    %16 = sbr.rel (0) target = $region17
  $region16: #{convblock_forward.1} parent=0 // pred_region
    _
  $region17: #{convblock_forward.1} parent=0 // pred_fallthru
    _
  %v17 = vld [vmem:[%s0] sm:$0xff]
  %v18 = vld [vmem:[%s0 + $0x8] sm:$0xff]
  %v19 = vld [vmem:[%s1] sm:$0xff]
  %v20 = vld [vmem:[%s1 + $0x8] sm:$0xff]
  %v21 = vld [vmem:[%s1 + $0x10] sm:$0xff]
  %v22 = vld [vmem:[%s1 + $0x18] sm:$0xff]
  %v23 = vld [vmem:[%s1 + $0x20] sm:$0xff]
  %v24 = vld [vmem:[%s1 + $0x28] sm:$0xff]
  %v25 = vld [vmem:[%s1 + $0x30] sm:$0xff]
  %v26 = vld [vmem:[%s1 + $0x38] sm:$0xff]
  %v27 = vld [vmem:[%s1 + $0x40] sm:$0xff]
  %v28 = vld [vmem:[%s1 + $0x48] sm:$0xff]
  %v29 = vld [vmem:[%s1 + $0x50] sm:$0xff]
  %v30 = vld [vmem:[%s1 + $0x58] sm:$0xff]
  %v31 = vld [vmem:[%s1 + $0x60] sm:$0xff]
  %v32 = vld [vmem:[%s1 + $0x68] sm:$0xff]
  %v33 = vld [vmem:[%s1 + $0x70] sm:$0xff]
  %v34 = vld [vmem:[%s1 + $0x78] sm:$0xff]
  %v35 = vld [vmem:[%s1 + $0x80] sm:$0xf]
  %v36 = vld [vmem:[%s1 + $0x88] sm:$0xf]
  %v37 = vld [vmem:[%s1 + $0x90] sm:$0xf]
  %v38 = vld [vmem:[%s1 + $0x98] sm:$0xf]
  %vm39 = vcmask 293888
  %v41 = vsel %vm39, %v17, 0
  %v44 = vsel %vm39, %v18, 0
  %vm46 = vcmask 1043456
  %v48 = vsel %vm46, %v35, 0
  %v51 = vsel %vm46, %v36, 0
  %v54 = vsel %vm46, %v37, 0
  %v57 = vsel %vm46, %v38, 0
  %59 = vmatprep.subr.mxu0 0.0
  %60 = vmatpush1.msra.mxu0 0.0
  %61 = vmatprep.subr.mxu0 0.0
  %62 = vmatpush1.msra.mxu0 0.0
  %63 = vmatprep.subr.mxu0 0.0
  %64 = vmatpush1.msra.mxu0 0.0
  %65 = vmatprep.subr.mxu0 0.0
  %66 = vmatpush1.msra.mxu0 0.0
  %67 = vmatprep.subr.mxu0 0.0
  %68 = vmatpush1.msra.mxu0 0.0
  %69 = vmatprep.subr.mxu0 0.0
  %70 = vmatpush1.msra.mxu0 0.0
  %71 = vmatprep.subr.mxu0 0.0
  %72 = vmatpush1.msra.mxu0 0.0
  %73 = vmatprep.subr.mxu0 0.0
  %74 = vmatpush1.msra.mxu0 0.0
  %75 = vmatprep.subr.mxu0 0.0
  %76 = vmatpush1.msra.mxu0 0.0
  %77 = vmatprep.subr.mxu0 0.0
  %78 = vmatpush1.msra.mxu0 0.0
  %79 = vmatprep.subr.mxu0 0.0
  %80 = vmatpush1.msra.mxu0 0.0
  %81 = vmatprep.subr.mxu0 %v51
  %82 = vmatpush1.msra.mxu0 %v48
  %83 = vmatprep.subr.mxu0 %v32
  %84 = vmatpush1.msra.mxu0 %v31
  %85 = vmatprep.subr.mxu0 %v28
  %86 = vmatpush1.msra.mxu0 %v27
  %87 = vmatprep.subr.mxu0 %v24
  %88 = vmatpush1.msra.mxu0 %v23
  %89 = vmatprep.subr.mxu0 %v20
  %90 = vmatpush1.msra.mxu0 %v19
  %91 = vmatprep.subr.mxu0 0.0
  %92 = vmatpush2.msra.mxu0 0.0
  %93 = vmatprep.subr.mxu0 0.0
  %94 = vmatpush2.msra.mxu0 0.0
  %95 = vmatprep.subr.mxu0 0.0
  %96 = vmatpush2.msra.mxu0 0.0
  %97 = vmatprep.subr.mxu0 0.0
  %98 = vmatpush2.msra.mxu0 0.0
  %99 = vmatprep.subr.mxu0 0.0
  %100 = vmatpush2.msra.mxu0 0.0
  %101 = vmatprep.subr.mxu0 0.0
  %102 = vmatpush2.msra.mxu0 0.0
  %103 = vmatprep.subr.mxu0 0.0
  %104 = vmatpush2.msra.mxu0 0.0
  %105 = vmatprep.subr.mxu0 0.0
  %106 = vmatpush2.msra.mxu0 0.0
  %107 = vmatprep.subr.mxu0 0.0
  %108 = vmatpush2.msra.mxu0 0.0
  %109 = vmatprep.subr.mxu0 0.0
  %110 = vmatpush2.msra.mxu0 0.0
  %111 = vmatprep.subr.mxu0 0.0
  %112 = vmatpush2.msra.mxu0 0.0
  %113 = vmatprep.subr.mxu0 0.0
  %114 = vmatpush2.msra.mxu0 0.0
  %115 = vmatprep.subr.mxu0 0.0
  %116 = vmatpush2.msra.mxu0 0.0
  %117 = vmatprep.subr.mxu0 0.0
  %118 = vmatpush2.msra.mxu0 0.0
  %119 = vmatprep.subr.mxu0 0.0
  %120 = vmatpush2.msra.mxu0 0.0
  %121 = vmatprep.subr.mxu0 0.0
  %122 = vmatpush2.msra.mxu0 0.0
  %123 = vmatprep.mubr.f32.mxu0 0.0
  %124 = vmatmul.mubr.f32.gmra.mxu0 %v41
  %v125 = vpop.f32.mrf.mxu0
  %v126 = vadd.f32 0.0, %v125
  %v127 = vpop.f32.mrf.mxu0
  %v128 = vadd.f32 0.0, %v127
  %129 = vmatprep.mubr.f32.mxu0 0.0
  %130 = vmatmul.mubr.f32.gmra.mxu0 %v44
  %v131 = vpop.f32.mrf.mxu0
  %v132 = vadd.f32 0.0, %v131
  %v133 = vpop.f32.mrf.mxu0
  %v134 = vadd.f32 0.0, %v133
  %135 = vdwg.mxu0
  %136 = vmatprep.subr.mxu0 0.0
  %137 = vmatpush1.msra.mxu0 0.0
  %138 = vmatprep.subr.mxu0 0.0
  %139 = vmatpush1.msra.mxu0 0.0
  %140 = vmatprep.subr.mxu0 0.0
  %141 = vmatpush1.msra.mxu0 0.0
  %142 = vmatprep.subr.mxu0 0.0
  %143 = vmatpush1.msra.mxu0 0.0
  %144 = vmatprep.subr.mxu0 0.0
  %145 = vmatpush1.msra.mxu0 0.0
  %146 = vmatprep.subr.mxu0 0.0
  %147 = vmatpush1.msra.mxu0 0.0
  %148 = vmatprep.subr.mxu0 0.0
  %149 = vmatpush1.msra.mxu0 0.0
  %150 = vmatprep.subr.mxu0 0.0
  %151 = vmatpush1.msra.mxu0 0.0
  %152 = vmatprep.subr.mxu0 0.0
  %153 = vmatpush1.msra.mxu0 0.0
  %154 = vmatprep.subr.mxu0 0.0
  %155 = vmatpush1.msra.mxu0 0.0
  %156 = vmatprep.subr.mxu0 0.0
  %157 = vmatpush1.msra.mxu0 0.0
  %158 = vmatprep.subr.mxu0 %v57
  %159 = vmatpush1.msra.mxu0 %v54
  %160 = vmatprep.subr.mxu0 %v34
  %161 = vmatpush1.msra.mxu0 %v33
  %162 = vmatprep.subr.mxu0 %v30
  %163 = vmatpush1.msra.mxu0 %v29
  %164 = vmatprep.subr.mxu0 %v26
  %165 = vmatpush1.msra.mxu0 %v25
  %166 = vmatprep.subr.mxu0 %v22
  %167 = vmatpush1.msra.mxu0 %v21
  %168 = vmatprep.subr.mxu0 0.0
  %169 = vmatpush2.msra.mxu0 0.0
  %170 = vmatprep.subr.mxu0 0.0
  %171 = vmatpush2.msra.mxu0 0.0
  %172 = vmatprep.subr.mxu0 0.0
  %173 = vmatpush2.msra.mxu0 0.0
  %174 = vmatprep.subr.mxu0 0.0
  %175 = vmatpush2.msra.mxu0 0.0
  %176 = vmatprep.subr.mxu0 0.0
  %177 = vmatpush2.msra.mxu0 0.0
  %178 = vmatprep.subr.mxu0 0.0
  %179 = vmatpush2.msra.mxu0 0.0
  %180 = vmatprep.subr.mxu0 0.0
  %181 = vmatpush2.msra.mxu0 0.0
  %182 = vmatprep.subr.mxu0 0.0
  %183 = vmatpush2.msra.mxu0 0.0
  %184 = vmatprep.subr.mxu0 0.0
  %185 = vmatpush2.msra.mxu0 0.0
  %186 = vmatprep.subr.mxu0 0.0
  %187 = vmatpush2.msra.mxu0 0.0
  %188 = vmatprep.subr.mxu0 0.0
  %189 = vmatpush2.msra.mxu0 0.0
  %190 = vmatprep.subr.mxu0 0.0
  %191 = vmatpush2.msra.mxu0 0.0
  %192 = vmatprep.subr.mxu0 0.0
  %193 = vmatpush2.msra.mxu0 0.0
  %194 = vmatprep.subr.mxu0 0.0
  %195 = vmatpush2.msra.mxu0 0.0
  %196 = vmatprep.subr.mxu0 0.0
  %197 = vmatpush2.msra.mxu0 0.0
  %198 = vmatprep.subr.mxu0 0.0
  %199 = vmatpush2.msra.mxu0 0.0
  %200 = vmatprep.mubr.f32.mxu0 0.0
  %201 = vmatmul.mubr.f32.gmra.mxu0 %v41
  %v202 = vpop.f32.mrf.mxu0
  %v203 = vadd.f32 0.0, %v202
  %v204 = vpop.f32.mrf.mxu0
  %v205 = vadd.f32 0.0, %v204
  %206 = vmatprep.mubr.f32.mxu0 0.0
  %207 = vmatmul.mubr.f32.gmra.mxu0 %v44
  %v208 = vpop.f32.mrf.mxu0
  %v209 = vadd.f32 0.0, %v208
  %v210 = vpop.f32.mrf.mxu0
  %v211 = vadd.f32 0.0, %v210
  %212 = vdwg.mxu0
  %v213 = vadd.f32 %v126, %v128
  %v214 = vadd.f32 %v213, %v203
  %v215 = vadd.f32 %v214, %v205
  %216 = vadd.xlane.f32.xlu0 %v215
  %v217 = vpop.xlane.xlu0 %216
  %v218 = vadd.f32 %v132, %v134
  %v219 = vadd.f32 %v218, %v209
  %v220 = vadd.f32 %v219, %v211
  %221 = vadd.xlane.f32.xlu0 %v220
  %v222 = vpop.xlane.xlu0 %221
  %v223 = vmul.f32 %v217, 0.001953125
  %v224 = vmul.f32 %v222, 0.001953125
  %v225 = vsub.f32 %v126, %v223
  %v226 = vsub.f32 %v128, %v223
  %v227 = vsub.f32 %v203, %v223
  %v228 = vsub.f32 %v205, %v223
  %v229 = vsub.f32 %v132, %v224
  %v230 = vsub.f32 %v134, %v224
  %v231 = vsub.f32 %v209, %v224
  %v232 = vsub.f32 %v211, %v224
  %v233 = vmul.f32 %v225, %v225
  %v234 = vmul.f32 %v226, %v226
  %v235 = vmul.f32 %v227, %v227
  %v236 = vmul.f32 %v228, %v228
  %v237 = vmul.f32 %v229, %v229
  %v238 = vmul.f32 %v230, %v230
  %v239 = vmul.f32 %v231, %v231
  %v240 = vmul.f32 %v232, %v232
  %v241 = vadd.f32 %v233, %v234
  %v242 = vadd.f32 %v241, %v235
  %v243 = vadd.f32 %v242, %v236
  %244 = vadd.xlane.f32.xlu0 %v243
  %v245 = vpop.xlane.xlu0 %244
  %v246 = vadd.f32 %v237, %v238
  %v247 = vadd.f32 %v246, %v239
  %v248 = vadd.f32 %v247, %v240
  %249 = vadd.xlane.f32.xlu0 %v248
  %v250 = vpop.xlane.xlu0 %249
  %v251 = vmul.f32 %v245, 0.001953125
  %v252 = vmul.f32 %v250, 0.001953125
  %v253 = vld [vmem:[%s2] sm:$0xff]
  %v254 = vld [vmem:[%s2 + $0x8] sm:$0xff]
  %v255 = vadd.f32 %v251, 1e-05
  %v256 = vadd.f32 %v252, 1e-05
  %v257 = vrsqrt.pop %v255
  %v258 = vrsqrt.pop %v256
  %v259 = vmul.f32 %v253, %v257
  %v260 = vmul.f32 %v254, %v258
  %262 = vset.pattern.permute.xlu0 0
  %263 = vperm.xlu0 %262, %v259
  %v264 = vpop.permute.xlu0 %263
  %267 = vset.pattern.permute.xlu0 0
  %268 = vperm.xlu0 %267, %v260
  %v269 = vpop.permute.xlu0 %268
  %v271 = vmul.f32 %v225, %v264
  %v272 = vmul.f32 %v226, %v264
  %v273 = vmul.f32 %v227, %v264
  %v274 = vmul.f32 %v228, %v264
  %v275 = vmul.f32 %v229, %v269
  %v276 = vmul.f32 %v230, %v269
  %v277 = vmul.f32 %v231, %v269
  %v278 = vmul.f32 %v232, %v269
  %v279 = vld [vmem:[%s3] sm:$0xff]
  %v280 = vld [vmem:[%s3 + $0x8] sm:$0xff]
  %282 = vset.pattern.permute.xlu0 0
  %283 = vperm.xlu0 %282, %v279
  %v284 = vpop.permute.xlu0 %283
  %287 = vset.pattern.permute.xlu0 0
  %288 = vperm.xlu0 %287, %v280
  %v289 = vpop.permute.xlu0 %288
  %v291 = vadd.f32 %v271, %v284
  %v292 = vadd.f32 %v272, %v284
  %v293 = vadd.f32 %v273, %v284
  %v294 = vadd.f32 %v274, %v284
  %v295 = vadd.f32 %v275, %v289
  %v296 = vadd.f32 %v276, %v289
  %v297 = vadd.f32 %v277, %v289
  %v298 = vadd.f32 %v278, %v289
  %v299 = vmax.f32 %v291, 0.0
  %v300 = vmax.f32 %v292, 0.0
  %v301 = vmax.f32 %v293, 0.0
  %v302 = vmax.f32 %v294, 0.0
  %v303 = vmax.f32 %v295, 0.0
  %v304 = vmax.f32 %v296, 0.0
  %v305 = vmax.f32 %v297, 0.0
  %v306 = vmax.f32 %v298, 0.0
  %307 = vst [vmem:[%s4] sm:$0xff] %v299
  %308 = vst [vmem:[%s4 + $0x8] sm:$0xff] %v300
  %309 = vst [vmem:[%s4 + $0x10] sm:$0xff] %v301
  %310 = vst [vmem:[%s4 + $0x18] sm:$0xff] %v302
  %311 = vst [vmem:[%s4 + $0x20] sm:$0xff] %v303
  %312 = vst [vmem:[%s4 + $0x28] sm:$0xff] %v304
  %313 = vst [vmem:[%s4 + $0x30] sm:$0xff] %v305
  %314 = vst [vmem:[%s4 + $0x38] sm:$0xff] %v306
  // Predicated region
  $region18: #{convblock_forward.1} parent=0 // pred_check
    _
  $region19: #{convblock_forward.1} parent=0 // pred_check_branch
    %316 = sbr.rel (0) target = $region21
  $region20: #{convblock_forward.1} parent=0 // pred_region
    _
  $region21: #{convblock_forward.1} parent=0 // pred_fallthru
    _
  // Predicated region
  $region22: #{convblock_forward.1} parent=0 // pred_check
    _
  $region23: #{convblock_forward.1} parent=0 // pred_check_branch
    %318 = sbr.rel (0) target = $region25
  $region24: #{convblock_forward.1} parent=0 // pred_region
    _
  $region25: #{convblock_forward.1} parent=0 // pred_fallthru
    _

</llo_original>
